<compile_context>
chip_gen: v7x
topology: tpu7x:2x2x1
jax: 0.10.0
libtpu: 0.0.40
codegen_flags: <defaults>
</compile_context>

<pallas_src>
from functools import partial

import jax
import jax.numpy as jnp
from jax.experimental import pallas as pl
from jax.experimental.pallas import tpu as pltpu


# ---------------------------------------------------------------------------
# Shape helpers
# ---------------------------------------------------------------------------
def _resolve_shape(shape, total):
    """Resolve a torch-style view shape (supports a single -1)."""
    shape = list(shape)
    if shape.count(-1) > 1:
        raise ValueError("only one -1 allowed in view shape")
    if -1 in shape:
        known = 1
        for s in shape:
            if s != -1:
                known *= s
        shape[shape.index(-1)] = total // known
    prod = 1
    for s in shape:
        prod *= s
    assert prod == total, f"view shape {shape} incompatible with {total} elements"
    return tuple(shape)


# Prefer wide, lane-dense slabs (lane multiple of 128; rows a multiple of 8
# when possible).  Returns None for ragged totals (handled by a whole-ref DMA).
_LANE_CANDIDATES = (8192, 4096, 2048, 1024, 512, 256, 128)


def _choose_slab_shape(total):
    for lane in _LANE_CANDIDATES:
        if total % lane == 0 and (total // lane) % 8 == 0:
            return total // lane, lane
    for lane in _LANE_CANDIDATES:
        if total % lane == 0:
            return total // lane, lane
    return None


# ---------------------------------------------------------------------------
# Materialize path A (default): chunked HBM -> HBM DMA copy.
# ---------------------------------------------------------------------------
_MAX_DMA_CHUNKS = 8
_DMA_CHUNK_TARGET_BYTES = 4 << 20  # aim for ~4 MiB per DMA chunk


def _make_chunked_dma_kernel(offsets, sizes):
    n = len(sizes)

    def kernel(x_ref, o_ref, sems):
        copies = []
        for i in range(n):  # static Python loop: offsets/sizes are trace-time
            cp = pltpu.make_async_copy(
                x_ref.at[pl.ds(offsets[i], sizes[i]), :],
                o_ref.at[pl.ds(offsets[i], sizes[i]), :],
                sems.at[i],
            )
            cp.start()
            copies.append(cp)
        for cp in copies:
            cp.wait()

    return kernel


def _whole_dma_kernel(x_ref, o_ref, sem):
    cp = pltpu.make_async_copy(x_ref, o_ref, sem)
    cp.start()
    cp.wait()


@partial(jax.jit, static_argnames=("tgt_shape",))
def _pallas_view_copy_dma(x, tgt_shape):
    total = x.size
    slab_shape = _choose_slab_shape(total)

    if slab_shape is None:
        # Ragged element count: single whole-array HBM->HBM DMA of the flat buffer.
        flat = jnp.reshape(x, (total,))
        out = pl.pallas_call(
            _whole_dma_kernel,
            out_shape=jax.ShapeDtypeStruct((total,), x.dtype),
            in_specs=[pl.BlockSpec(memory_space=pl.ANY)],
            out_specs=pl.BlockSpec(memory_space=pl.ANY),
            scratch_shapes=[pltpu.SemaphoreType.DMA],
        )(flat)
        return jnp.reshape(out, tgt_shape)

    rows, lanes = slab_shape
    slab = jnp.reshape(x, (rows, lanes))
    nbytes = total * jnp.dtype(x.dtype).itemsize
    n_chunks = int(
        min(_MAX_DMA_CHUNKS, rows, max(1, nbytes // _DMA_CHUNK_TARGET_BYTES))
    )
    base, rem = divmod(rows, n_chunks)
    sizes, offsets, off = [], [], 0
    for i in range(n_chunks):
        sz = base + (1 if i < rem else 0)
        sizes.append(sz)
        offsets.append(off)
        off += sz

    out = pl.pallas_call(
        _make_chunked_dma_kernel(tuple(offsets), tuple(sizes)),
        out_shape=jax.ShapeDtypeStruct((rows, lanes), x.dtype),
        in_specs=[pl.BlockSpec(memory_space=pl.ANY)],
        out_specs=pl.BlockSpec(memory_space=pl.ANY),
        scratch_shapes=[pltpu.SemaphoreType.DMA((n_chunks,))],
    )(slab)
    return jnp.reshape(out, tgt_shape)


# ---------------------------------------------------------------------------
# Materialize path B (fallback): tiled VMEM copy through BlockSpec pipelining.
# ---------------------------------------------------------------------------
_PER_BUFFER_BYTES = 8 << 20   # <= 8 MiB per pipeline buffer: 2 in + 2 out
                              # double buffers stay <= 32 MiB (fits v7x 64 MiB VMEM)
_VMEM_LIMIT_BYTES = 48 << 20  # explicit scoped-VMEM limit (v5e default is 16 MiB)


def _copy_kernel(x_ref, o_ref):
    o_ref[...] = x_ref[...]


def _choose_block_rows(rows, lanes, itemsize):
    budget_rows = max(8, (_PER_BUFFER_BYTES // (lanes * itemsize)) // 8 * 8)
    if rows <= budget_rows:
        if rows >= 16:
            # Split into >= 2 blocks so both v7x TensorCores get work.
            half = (rows + 1) // 2
            return ((half + 7) // 8) * 8
        return rows  # single block equal to full extent (always layout-legal)
    return budget_rows


@partial(jax.jit, static_argnames=("tgt_shape",))
def _pallas_view_copy_blockspec(x, tgt_shape):
    total = x.size
    slab_shape = _choose_slab_shape(total)
    if slab_shape is None:
        # Ragged totals would need padding for the VMEM path; use the DMA path.
        return _pallas_view_copy_dma(x, tgt_shape)

    rows, lanes = slab_shape
    slab = jnp.reshape(x, (rows, lanes))
    block_rows = _choose_block_rows(rows, lanes, jnp.dtype(x.dtype).itemsize)
    grid = (pl.cdiv(rows, block_rows),)

    out = pl.pallas_call(
        _copy_kernel,
        out_shape=jax.ShapeDtypeStruct((rows, lanes), slab.dtype),
        grid=grid,
        in_specs=[pl.BlockSpec((block_rows, lanes), lambda i: (i, 0))],
        out_specs=pl.BlockSpec((block_rows, lanes), lambda i: (i, 0)),
        compiler_params=pltpu.CompilerParams(
            dimension_semantics=("parallel",),   # shard rows across TCs (v7x)
            vmem_limit_bytes=_VMEM_LIMIT_BYTES,
        ),
    )(slab)
    return jnp.reshape(out, tgt_shape)


# ---------------------------------------------------------------------------
# Module
# ---------------------------------------------------------------------------
class View:
    """JAX/Pallas equivalent of the PyTorch View module.

    Default: zero-cost metadata reshape (matches torch .view on contiguous
    input).  materialize=True forces a physical copy; copy_impl selects the
    chunked HBM->HBM DMA kernel ("dma", default) or the tiled VMEM copy
    ("blockspec").
    """

    def __init__(self, shape, materialize=False, copy_impl="dma"):
        self.shape = tuple(shape)
        self.materialize = materialize
        self.copy_impl = copy_impl

    def __call__(self, x):
        tgt_shape = _resolve_shape(self.shape, x.size)
        if not self.materialize:
            # Pure metadata op — no kernel, no HBM traffic.
            return jnp.reshape(x, tgt_shape)
        if self.copy_impl == "blockspec":
            return _pallas_view_copy_blockspec(x, tgt_shape)
        return _pallas_view_copy_dma(x, tgt_shape)


# ---------------------------------------------------------------------------
# Demo / self-check
# ---------------------------------------------------------------------------
if __name__ == "__main__":
    key = jax.random.PRNGKey(0)
    B, C, H, W = 2, 4, 16, 16
    x = jax.random.normal(key, (B, C, H, W), dtype=jnp.float32)

    ref = jnp.reshape(x, (B, C * H * W))

    # Default (recommended) path: zero-cost metadata reshape.
    y_meta = jax.block_until_ready(View((B, -1))(x))
    assert y_meta.shape == (B, C * H * W), y_meta.shape
    assert y_meta.dtype == x.dtype
    assert bool(jnp.all(y_meta == ref))

    # Materializing path (chunked HBM->HBM DMA kernel).
    y_dma = jax.block_until_ready(View((B, -1), materialize=True)(x))
    assert y_dma.shape == (B, C * H * W), y_dma.shape
    assert y_dma.dtype == x.dtype
    assert bool(jnp.all(y_dma == ref))

    # Materializing path (tiled BlockSpec VMEM copy fallback).
    y_bs = jax.block_until_ready(
        View((B, -1), materialize=True, copy_impl="blockspec")(x)
    )
    assert y_bs.shape == (B, C * H * W), y_bs.shape
    assert bool(jnp.all(y_bs == ref))

    # Ragged element count (105 elems, not a multiple of 128) exercises the
    # whole-array DMA fallback instead of the old (1, total) VMEM block.
    x2 = jax.random.normal(jax.random.PRNGKey(1), (3, 5, 7), dtype=jnp.float32)
    y2 = jax.block_until_ready(View((-1,), materialize=True)(x2))
    assert y2.shape == (105,)
    assert bool(jnp.all(y2 == jnp.reshape(x2, (105,))))

    print("KERNEL_OK")
</pallas_src>

<mosaic_0001>
module attributes {stable_mosaic.version = 11 : i64} {
  func.func @kernel(%arg0: memref<8x256xf32, #tpu.memory_space<any>>, %arg1: memref<8x256xf32, #tpu.memory_space<any>>, %arg2: memref<1x!tpu.dma_semaphore, #tpu.memory_space<semaphore_mem>>) attributes {dimension_semantics = [], scalar_prefetch = 0 : i64, scratch_operands = 1 : i64, tpu.core_type = #tpu.core_type<tc>} {
    %c0_i32 = arith.constant 0 : i32
    %c0_i32_0 = arith.constant 0 : i32
    %c0_i32_1 = arith.constant 0 : i32
    %0 = tpu.memref_slice %arg0[%c0_i32_0, %c0_i32_1] : memref<8x256xf32, #tpu.memory_space<any>> -> memref<8x256xf32, #tpu.memory_space<any>>
    %c0_i32_2 = arith.constant 0 : i32
    %c0_i32_3 = arith.constant 0 : i32
    %1 = tpu.memref_slice %arg1[%c0_i32_2, %c0_i32_3] : memref<8x256xf32, #tpu.memory_space<any>> -> memref<8x256xf32, #tpu.memory_space<any>>
    %2 = tpu.memref_slice %arg2[%c0_i32] : memref<1x!tpu.dma_semaphore, #tpu.memory_space<semaphore_mem>> -> memref<1x!tpu.dma_semaphore, #tpu.memory_space<semaphore_mem>>
    %3 = tpu.memref_squeeze %2 : memref<1x!tpu.dma_semaphore, #tpu.memory_space<semaphore_mem>> -> memref<!tpu.dma_semaphore, #tpu.memory_space<semaphore_mem>>
    tpu.enqueue_dma source(%0 : memref<8x256xf32, #tpu.memory_space<any>>) target(%1 : memref<8x256xf32, #tpu.memory_space<any>>) target_semaphore(%3 : memref<!tpu.dma_semaphore, #tpu.memory_space<semaphore_mem>>)
    %c0_i32_4 = arith.constant 0 : i32
    %c0_i32_5 = arith.constant 0 : i32
    %c0_i32_6 = arith.constant 0 : i32
    %4 = tpu.memref_slice %arg0[%c0_i32_5, %c0_i32_6] : memref<8x256xf32, #tpu.memory_space<any>> -> memref<8x256xf32, #tpu.memory_space<any>>
    %c0_i32_7 = arith.constant 0 : i32
    %c0_i32_8 = arith.constant 0 : i32
    %5 = tpu.memref_slice %arg1[%c0_i32_7, %c0_i32_8] : memref<8x256xf32, #tpu.memory_space<any>> -> memref<8x256xf32, #tpu.memory_space<any>>
    %6 = tpu.memref_slice %arg2[%c0_i32_4] : memref<1x!tpu.dma_semaphore, #tpu.memory_space<semaphore_mem>> -> memref<1x!tpu.dma_semaphore, #tpu.memory_space<semaphore_mem>>
    %7 = tpu.memref_squeeze %6 : memref<1x!tpu.dma_semaphore, #tpu.memory_space<semaphore_mem>> -> memref<!tpu.dma_semaphore, #tpu.memory_space<semaphore_mem>>
    tpu.wait_dma2 semaphore(%7 : memref<!tpu.dma_semaphore, #tpu.memory_space<semaphore_mem>>) src(%4 : memref<8x256xf32, #tpu.memory_space<any>>) dst(%5 : memref<8x256xf32, #tpu.memory_space<any>>)
    return
  }
}

</mosaic_0001>

<llo_original>
// kernel: _pallas_view_copy_dma.1
$region0: #{_pallas_view_copy_dma.1}
  #allocation0 [shape = 'u32[]', space=smem, size = 0x4, offset = 0x4, fixed_abs, tag = 'smem constant byte address 0x4 - core index']
  #allocation1 [shape = 'u32[144,128]{1,0:T(1,128)}', space=vmem, size = 0x12000, scoped, tag = 'internal scratch']
  #allocation2 [shape = 's32[1]{0}', space=sflag, size = 0x4, scoped, tag = 'scratch operand']
  #allocation3 [shape = 's32[]', space=sflag, size = 0x4, offset = 0, fixed_abs, tag = 'sflag constant byte address 0x0 - dummy sync flag']
  %s0 = inlined_call_operand.vmem [shape: f32[8,256], index: 0, kind: input, shape index: {}]
  %s1 = inlined_call_operand.vmem [shape: f32[8,256], index: 1, kind: output, shape index: {}]
  %s2 = sld [smem:[#allocation0]]
  $region36: #{_pallas_view_copy_dma.1} parent=0
    _
  %s4 = ssub.s32 1, %s2
  %s5 = scalar_select 0, %s4, %s2
  %p7 = scmp.lt.u32.totalorder 16, 8
  %p8 = pneg %p7
  // Predicated region
  $region2: #{_pallas_view_copy_dma.1} parent=0 // pred_check
    _
  $region3: #{_pallas_view_copy_dma.1} parent=0 // pred_check_branch
    %10 = sbr.rel (%p7) target = $region5
  $region4: #{_pallas_view_copy_dma.1} parent=0 // pred_region
    %s25 = sand.u32 16, 7
    %p26 = scmp.eq.s32.totalorder %s25, 0
    // Predicated region
    $region17: #{_pallas_view_copy_dma.1} parent=4 // pred_check
      %p27 = pneg %p26
    $region18: #{_pallas_view_copy_dma.1} parent=4 // pred_check_branch
      %29 = sbr.rel (%p27) target = $region20
    $region19: #{_pallas_view_copy_dma.1} parent=4 // pred_region
      loop: start=0, step=1, limit=1
      $region21: #{_pallas_view_copy_dma.1} parent=19 // loop_pre_header
        _
      $region22: #{_pallas_view_copy_dma.1} parent=19 // loop_header
        %s31 = sphi 0, %s35
        %p32 = scmp.ge.s32.totalorder %s31, 1
        %s36 = sphi %s0, %s0
        %s37 = sphi %s1, %s1
      $region23: #{_pallas_view_copy_dma.1} parent=19 // loop_header_branch
        %34 = sbr.rel (%p32) target = $region27
      $region24: #{_pallas_view_copy_dma.1} parent=19 // loop_body
        %v38 = vld [vmem:[%s36] sm:$0xff]
        %39 = vst [vmem:[%s37] sm:$0xff] %v38
        %v40 = vld [vmem:[%s36 + $0x8] sm:$0xff]
        %41 = vst [vmem:[%s37 + $0x8] sm:$0xff] %v40
      $region25: #{_pallas_view_copy_dma.1} parent=19 // loop_footer
        %s35 = sadd.s32 1, %s31
      $region26: #{_pallas_view_copy_dma.1} parent=19 // loop_footer_branch
        %30 = sbr.rel target = $region22
      $region27: #{_pallas_view_copy_dma.1} parent=19 // loop_exit
        _
    $region20: #{_pallas_view_copy_dma.1} parent=4 // pred_fallthru
      _
    %p42 = pneg %p26
    // Predicated region
    $region28: #{_pallas_view_copy_dma.1} parent=4 // pred_check
      _
    $region29: #{_pallas_view_copy_dma.1} parent=4 // pred_check_branch
      %44 = sbr.rel (%p26) target = $region31
    $region30: #{_pallas_view_copy_dma.1} parent=4 // pred_region
      %s45 = sand.u32 16, 7
    $region31: #{_pallas_view_copy_dma.1} parent=4 // pred_fallthru
      _
  $region5: #{_pallas_view_copy_dma.1} parent=0 // pred_fallthru
    _
  // Predicated region
  $region6: #{_pallas_view_copy_dma.1} parent=0 // pred_check
    %p11 = pneg %p7
  $region7: #{_pallas_view_copy_dma.1} parent=0 // pred_check_branch
    %13 = sbr.rel (%p11) target = $region9
  $region8: #{_pallas_view_copy_dma.1} parent=0 // pred_region
    %s14 = sshllo.u32 0, 16
    loop: start=0, step=1, limit=1
    $region10: #{_pallas_view_copy_dma.1} parent=8 // loop_pre_header
      _
    $region11: #{_pallas_view_copy_dma.1} parent=8 // loop_header
      %s16 = sphi 0, %s20
      %p17 = scmp.ge.s32.totalorder %s16, 1
      %s21 = sphi %s0, %s0
      %s22 = sphi %s1, %s1
    $region12: #{_pallas_view_copy_dma.1} parent=8 // loop_header_branch
      %19 = sbr.rel (%p17) target = $region16
    $region13: #{_pallas_view_copy_dma.1} parent=8 // loop_body
      %v23 = vld [vmem:[%s21] sm:%s14]
      %24 = vst [vmem:[%s22] sm:%s14] %v23
    $region14: #{_pallas_view_copy_dma.1} parent=8 // loop_footer
      %s20 = sadd.s32 1, %s16
    $region15: #{_pallas_view_copy_dma.1} parent=8 // loop_footer_branch
      %15 = sbr.rel target = $region11
    $region16: #{_pallas_view_copy_dma.1} parent=8 // loop_exit
      _
  $region9: #{_pallas_view_copy_dma.1} parent=0 // pred_fallthru
    _
  // Predicated region
  $region32: #{_pallas_view_copy_dma.1} parent=0 // pred_check
    _
  $region33: #{_pallas_view_copy_dma.1} parent=0 // pred_check_branch
    %48 = sbr.rel (0) target = $region35
  $region34: #{_pallas_view_copy_dma.1} parent=0 // pred_region
    %49 = vsyncadd [#allocation2], 256
  $region35: #{_pallas_view_copy_dma.1} parent=0 // pred_fallthru
    _
  %s50 = smul.u32 8, 1
  %s51 = smul.u32 %s50, 2
  %s52 = sshll.u32 %s51, 4
  %53 = dma.done [#allocation2], %s52
  %54 = vsyncmov [#allocation2]
  %s55 = vpop.sfrf %54
  %p56 = scmp.eq.s32.totalorder %s55, 0
  %p57 = pneg %p56
  %59 = shalt.err (%p57)

</llo_original>
